<compile_context>
chip_gen: v7x
topology: tpu7x:2x2x1
jax: 0.10.0
libtpu: 0.0.40
codegen_flags: <defaults>
</compile_context>

<pallas_src>
import math
from functools import partial

import jax
import jax.numpy as jnp
from jax.experimental import pallas as pl
from jax.experimental.pallas import tpu as pltpu

LANE = 128      # vreg lane width (last dim)
SUBLANE = 8     # vreg sublane width (second-last dim)


def _round_up(x, m):
    return (x + m - 1) // m * m


# ----------------------------- Fused Pallas kernel ------------------------------

def _make_fused_mlp_kernel(n_hidden):
    """One batch tile through the whole MLP.

    Ref order: x, w0, w_stack, shift_stack, out.
      x           : (tm, Din)                 f32   (natural K, no pad)
      w0          : (Din, W)                  bf16  (layer-0 weight, BN scale folded in)
      w_stack     : (n_hidden, W, W)          bf16  (hidden layers 1..n-1 + final weight)
      shift_stack : (n_hidden + 1, 1, W)      f32   (hidden shifts + final bias)
      out         : (tm, W)                   bf16  (lane-dense, 128-wide store)
    """

    def kernel(x_ref, w0_ref, ws_ref, sh_ref, o_ref):
        h = x_ref[...]                                           # (tm, Din) f32
        # Layer 0: Linear with BN scale folded into the weight, then shift + ReLU.
        y = jnp.dot(h.astype(jnp.bfloat16), w0_ref[...],
                    preferred_element_type=jnp.float32)
        h = jnp.maximum(y + sh_ref[0], 0.0)                      # (tm, W) f32
        # TODO(synk): nn.Dropout is stochastic in training mode; eval mode => identity.
        # Remaining hidden layers (static unroll).
        for l in range(1, n_hidden):
            y = jnp.dot(h.astype(jnp.bfloat16), ws_ref[l - 1],
                        preferred_element_type=jnp.float32)
            h = jnp.maximum(y + sh_ref[l], 0.0)
        # Final Linear (no BN/ReLU).
        y = jnp.dot(h.astype(jnp.bfloat16), ws_ref[n_hidden - 1],
                    preferred_element_type=jnp.float32) + sh_ref[n_hidden]
        o_ref[...] = y.astype(o_ref.dtype)                       # lane-dense (tm, 128) store

    return kernel


def fused_mlp_forward(prepped, latent_vector):
    """Eval-mode forward. latent_vector: (B, latent_dim) -> (B, num_classes) f32."""
    x = latent_vector.astype(jnp.float32)
    B, Din = x.shape
    W = prepped["width"]
    num_classes = prepped["num_classes"]
    n_hidden = prepped["n_hidden"]

    # Batch-tile selection:
    #   B <= 128         : single sublane-aligned tile
    #   128 < B <= 512   : tm = 128 -> >=2 parallel tiles (v7x dual-TC)
    #   B > 512          : tm = 256 -> fills v6e/v7x 256-wide MXU, amortizes step overhead
    if B <= 128:
        tm = _round_up(B, SUBLANE)
    elif B <= 512:
        tm = 128
    else:
        tm = 256

    w0, w_stack, shift_stack = prepped["w0"], prepped["w_stack"], prepped["shift_stack"]

    out = pl.pallas_call(
        _make_fused_mlp_kernel(n_hidden),
        out_shape=jax.ShapeDtypeStruct((B, W), jnp.bfloat16),
        grid=(pl.cdiv(B, tm),),
        in_specs=[
            pl.BlockSpec((tm, Din), lambda i: (i, 0)),
            pl.BlockSpec(w0.shape, lambda i: (0, 0)),
            pl.BlockSpec(w_stack.shape, lambda i: (0, 0, 0)),
            pl.BlockSpec(shift_stack.shape, lambda i: (0, 0, 0)),
        ],
        out_specs=pl.BlockSpec((tm, W), lambda i: (i, 0)),
        compiler_params=pltpu.CompilerParams(
            dimension_semantics=("parallel",),
        ),
    )(x, w0, w_stack, shift_stack)

    return out[:, :num_classes].astype(jnp.float32)


# ------------------------- Parameter construction --------------------------

def _torch_linear_init(key, in_features, out_features):
    """Mimic nn.Linear default init (kaiming uniform, bound = 1/sqrt(fan_in))."""
    kw, kb = jax.random.split(key)
    bound = 1.0 / math.sqrt(in_features)
    w = jax.random.uniform(kw, (out_features, in_features), jnp.float32, -bound, bound)
    b = jax.random.uniform(kb, (out_features,), jnp.float32, -bound, bound)
    return w, b


def make_params(key, latent_dim, num_classes, hidden_units_list):
    all_units = [latent_dim] + hidden_units_list
    params = {"hidden": [], "final": None}
    keys = jax.random.split(key, len(all_units))
    for i in range(len(all_units)):
        if i < len(all_units) - 1:
            din, dout = all_units[i], all_units[i + 1]
            w, b = _torch_linear_init(keys[i], din, dout)
            bn = {
                "gamma": jnp.ones((dout,), jnp.float32),
                "beta": jnp.zeros((dout,), jnp.float32),
                "running_mean": jnp.zeros((dout,), jnp.float32),
                "running_var": jnp.ones((dout,), jnp.float32),
                "eps": 1e-5,
            }
            params["hidden"].append({"w": w, "b": b, "bn": bn})
        else:
            w, b = _torch_linear_init(keys[i], all_units[i], num_classes)
            params["final"] = {"w": w, "b": b}
    return params


def prepare_params(params, latent_dim):
    """One-time prep: transpose weights, fold eval-mode BN (scale INTO the weight,
    shift kept separately), zero-pad every OUTPUT feature dim to a common 128-multiple
    width W, stack the per-layer params into 3 arrays, and cast weights to bf16.

    Padded activation lanes stay exactly zero (zero weight cols + zero shift + ReLU),
    so folding garbage-free through every layer."""
    n_hidden = len(params["hidden"])
    assert n_hidden >= 1, "expected at least one hidden layer"

    out_dims = [l["w"].shape[0] for l in params["hidden"]] + [params["final"]["w"].shape[0]]
    W = max(_round_up(d, LANE) for d in out_dims)     # common padded output width

    def fold(layer):
        w, b, bn = layer["w"], layer["b"], layer["bn"]
        inv_std = 1.0 / jnp.sqrt(bn["running_var"] + bn["eps"])
        scale = bn["gamma"] * inv_std                                  # (dout,)
        shift = bn["beta"] + (b - bn["running_mean"]) * scale          # (dout,)
        wt = w.T * scale[None, :]                                      # (din, dout), BN folded
        return wt, shift

    # Layer 0: natural K = latent_dim, padded N = W.
    wt0, sh0 = fold(params["hidden"][0])
    dout0 = wt0.shape[1]
    w0 = jnp.zeros((latent_dim, W), jnp.float32).at[:, :dout0].set(wt0)
    shifts = [jnp.zeros((1, W), jnp.float32).at[0, :dout0].set(sh0)]

    # Hidden layers 1..n-1 + final layer: padded (W, W) weights.
    w_list = []
    prev_dout = dout0
    for layer in params["hidden"][1:]:
        wt, sh = fold(layer)
        din, dout = wt.shape
        assert din == prev_dout
        w_list.append(jnp.zeros((W, W), jnp.float32).at[:din, :dout].set(wt))
        shifts.append(jnp.zeros((1, W), jnp.float32).at[0, :dout].set(sh))
        prev_dout = dout

    wf, bf = params["final"]["w"], params["final"]["b"]
    nc, din = wf.shape
    assert din == prev_dout
    w_list.append(jnp.zeros((W, W), jnp.float32).at[:din, :nc].set(wf.T))
    shifts.append(jnp.zeros((1, W), jnp.float32).at[0, :nc].set(bf))

    return {
        "w0": w0.astype(jnp.bfloat16),                         # (Din, W) bf16
        "w_stack": jnp.stack(w_list).astype(jnp.bfloat16),     # (n_hidden, W, W) bf16
        "shift_stack": jnp.stack(shifts),                      # (n_hidden+1, 1, W) f32
        "width": W,
        "num_classes": nc,
        "n_hidden": n_hidden,
    }


# --------------------------------- Main -------------------------------------

if __name__ == "__main__":
    latent_dim = 32
    num_classes = 2
    hidden_units_list = [64, 32]
    batch = 8

    root = jax.random.PRNGKey(0)
    k_params, k_x = jax.random.split(root)

    params = make_params(k_params, latent_dim, num_classes, hidden_units_list)
    prepped = prepare_params(params, latent_dim)   # one-time: fold BN, transpose, pad, stack, bf16
    forward = jax.jit(partial(fused_mlp_forward, prepped))

    latent_vector = jax.random.normal(k_x, (batch, latent_dim), jnp.float32)

    out = forward(latent_vector)
    out = jax.block_until_ready(out)

    # Reference check in plain JAX (same eval-mode semantics, f32, unpadded).
    x_ref = latent_vector
    for layer in params["hidden"]:
        y = x_ref @ layer["w"].T + layer["b"]
        bn = layer["bn"]
        y = (y - bn["running_mean"]) / jnp.sqrt(bn["running_var"] + bn["eps"])
        y = y * bn["gamma"] + bn["beta"]
        x_ref = jnp.maximum(y, 0.0)
    ref = x_ref @ params["final"]["w"].T + params["final"]["b"]

    assert out.shape == (batch, num_classes)
    # bf16 weights/activations/output -> looser tolerance than f32.
    assert jnp.allclose(out, ref, atol=5e-2, rtol=5e-2), (out, ref)
    print("KERNEL_OK")
</pallas_src>

<mosaic_0001>
module attributes {stable_mosaic.version = 11 : i64} {
  func.func @kernel(%arg0: i32, %arg1: memref<8x32xf32, #tpu.memory_space<vmem>>, %arg2: memref<32x128xbf16, #tpu.memory_space<vmem>>, %arg3: memref<2x128x128xbf16, #tpu.memory_space<vmem>>, %arg4: memref<3x1x128xf32, #tpu.memory_space<vmem>>, %arg5: memref<8x128xbf16, #tpu.memory_space<vmem>>) attributes {dimension_semantics = [#tpu.dimension_semantics<parallel>], iteration_bounds = array<i64: 1>, scalar_prefetch = 0 : i64, scratch_operands = 0 : i64, tpu.core_type = #tpu.core_type<tc>, window_params = [{transform_indices = @transform_0, window_bounds = array<i64: 8, 32>}, {pipeline_mode = #tpu.pipeline_mode<synchronous>, transform_indices = @transform_1, window_bounds = array<i64: 32, 128>}, {pipeline_mode = #tpu.pipeline_mode<synchronous>, transform_indices = @transform_2, window_bounds = array<i64: 2, 128, 128>}, {pipeline_mode = #tpu.pipeline_mode<synchronous>, transform_indices = @transform_3, window_bounds = array<i64: 3, 1, 128>}, {transform_indices = @transform_4, window_bounds = array<i64: 8, 128>}]} {
    %c0 = arith.constant 0 : index
    %c0_0 = arith.constant 0 : index
    %0 = vector.load %arg1[%c0, %c0_0] : memref<8x32xf32, #tpu.memory_space<vmem>>, vector<8x32xf32>
    %1 = arith.truncf %0 : vector<8x32xf32> to vector<8x32xbf16>
    %c0_1 = arith.constant 0 : index
    %c0_2 = arith.constant 0 : index
    %2 = vector.load %arg2[%c0_1, %c0_2] : memref<32x128xbf16, #tpu.memory_space<vmem>>, vector<32x128xbf16>
    %cst = arith.constant dense<0.000000e+00> : vector<8x128xf32>
    %3 = tpu.matmul %1, %2, %cst {dimension_numbers = #tpu.dot_dimension_numbers<[1], [0], [0], [1], [0, 0, 1, 1], [], []>} : vector<8x32xbf16>, vector<32x128xbf16>, vector<8x128xf32> -> vector<8x128xf32>
    %c0_3 = arith.constant 0 : index
    %c0_4 = arith.constant 0 : index
    %c0_5 = arith.constant 0 : index
    %4 = vector.load %arg4[%c0_3, %c0_4, %c0_5] : memref<3x1x128xf32, #tpu.memory_space<vmem>>, vector<1x1x128xf32>
    %5 = vector.shape_cast %4 : vector<1x1x128xf32> to vector<1x128xf32>
    %6 = vector.broadcast %5 : vector<1x128xf32> to vector<8x128xf32>
    %7 = arith.addf %3, %6 : vector<8x128xf32>
    %cst_6 = arith.constant 0.000000e+00 : f32
    %8 = vector.broadcast %cst_6 : f32 to vector<8x128xf32>
    %9 = arith.maximumf %7, %8 : vector<8x128xf32>
    %10 = arith.truncf %9 : vector<8x128xf32> to vector<8x128xbf16>
    %c0_7 = arith.constant 0 : index
    %c0_8 = arith.constant 0 : index
    %c0_9 = arith.constant 0 : index
    %11 = vector.load %arg3[%c0_7, %c0_8, %c0_9] : memref<2x128x128xbf16, #tpu.memory_space<vmem>>, vector<1x128x128xbf16>
    %12 = vector.shape_cast %11 : vector<1x128x128xbf16> to vector<128x128xbf16>
    %cst_10 = arith.constant dense<0.000000e+00> : vector<8x128xf32>
    %13 = tpu.matmul %10, %12, %cst_10 {dimension_numbers = #tpu.dot_dimension_numbers<[1], [0], [0], [1], [0, 0, 1, 1], [], []>} : vector<8x128xbf16>, vector<128x128xbf16>, vector<8x128xf32> -> vector<8x128xf32>
    %c1 = arith.constant 1 : index
    %c0_11 = arith.constant 0 : index
    %c0_12 = arith.constant 0 : index
    %14 = vector.load %arg4[%c1, %c0_11, %c0_12] : memref<3x1x128xf32, #tpu.memory_space<vmem>>, vector<1x1x128xf32>
    %15 = vector.shape_cast %14 : vector<1x1x128xf32> to vector<1x128xf32>
    %16 = vector.broadcast %15 : vector<1x128xf32> to vector<8x128xf32>
    %17 = arith.addf %13, %16 : vector<8x128xf32>
    %cst_13 = arith.constant 0.000000e+00 : f32
    %18 = vector.broadcast %cst_13 : f32 to vector<8x128xf32>
    %19 = arith.maximumf %17, %18 : vector<8x128xf32>
    %20 = arith.truncf %19 : vector<8x128xf32> to vector<8x128xbf16>
    %c1_14 = arith.constant 1 : index
    %c0_15 = arith.constant 0 : index
    %c0_16 = arith.constant 0 : index
    %21 = vector.load %arg3[%c1_14, %c0_15, %c0_16] : memref<2x128x128xbf16, #tpu.memory_space<vmem>>, vector<1x128x128xbf16>
    %22 = vector.shape_cast %21 : vector<1x128x128xbf16> to vector<128x128xbf16>
    %cst_17 = arith.constant dense<0.000000e+00> : vector<8x128xf32>
    %23 = tpu.matmul %20, %22, %cst_17 {dimension_numbers = #tpu.dot_dimension_numbers<[1], [0], [0], [1], [0, 0, 1, 1], [], []>} : vector<8x128xbf16>, vector<128x128xbf16>, vector<8x128xf32> -> vector<8x128xf32>
    %c2 = arith.constant 2 : index
    %c0_18 = arith.constant 0 : index
    %c0_19 = arith.constant 0 : index
    %24 = vector.load %arg4[%c2, %c0_18, %c0_19] : memref<3x1x128xf32, #tpu.memory_space<vmem>>, vector<1x1x128xf32>
    %25 = vector.shape_cast %24 : vector<1x1x128xf32> to vector<1x128xf32>
    %26 = vector.broadcast %25 : vector<1x128xf32> to vector<8x128xf32>
    %27 = arith.addf %23, %26 : vector<8x128xf32>
    %28 = arith.truncf %27 : vector<8x128xf32> to vector<8x128xbf16>
    %c0_20 = arith.constant 0 : index
    %c0_21 = arith.constant 0 : index
    %29 = vector.load %arg5[%c0_20, %c0_21] : memref<8x128xbf16, #tpu.memory_space<vmem>>, vector<8x128xbf16>
    tpu.vector_store %arg5[%c0_20, %c0_21], %28 {strides = array<i32>} : memref<8x128xbf16, #tpu.memory_space<vmem>>, vector<8x128xbf16>,
    return
  }
  func.func @transform_0(%arg0: i32) -> (i32, i32) {
    %c0_i32 = arith.constant 0 : i32
    %c0_i32_0 = arith.constant 0 : i32
    return %arg0, %c0_i32 : i32, i32
  }
  func.func @transform_1(%arg0: i32) -> (i32, i32) {
    %c0_i32 = arith.constant 0 : i32
    %c0_i32_0 = arith.constant 0 : i32
    %c0_i32_1 = arith.constant 0 : i32
    return %c0_i32, %c0_i32_0 : i32, i32
  }
  func.func @transform_2(%arg0: i32) -> (i32, i32, i32) {
    %c0_i32 = arith.constant 0 : i32
    %c0_i32_0 = arith.constant 0 : i32
    %c0_i32_1 = arith.constant 0 : i32
    %c0_i32_2 = arith.constant 0 : i32
    return %c0_i32, %c0_i32_0, %c0_i32_1 : i32, i32, i32
  }
  func.func @transform_3(%arg0: i32) -> (i32, i32, i32) {
    %c0_i32 = arith.constant 0 : i32
    %c0_i32_0 = arith.constant 0 : i32
    %c0_i32_1 = arith.constant 0 : i32
    %c0_i32_2 = arith.constant 0 : i32
    return %c0_i32, %c0_i32_0, %c0_i32_1 : i32, i32, i32
  }
  func.func @transform_4(%arg0: i32) -> (i32, i32) {
    %c0_i32 = arith.constant 0 : i32
    %c0_i32_0 = arith.constant 0 : i32
    return %arg0, %c0_i32 : i32, i32
  }
}

</mosaic_0001>

<llo_original>
// kernel: fused_mlp_forward.1
$region0: #{fused_mlp_forward.1}
  #allocation0 [shape = 'u32[]', space=smem, size = 0x4, offset = 0x4, fixed_abs, tag = 'smem constant byte address 0x4 - core index']
  #allocation1 [shape = 'u32[144,128]{1,0:T(1,128)}', space=vmem, size = 0x12000, scoped, tag = 'internal scratch']
  %s0 = inlined_call_operand.hbm [shape: f32[8,32], index: 0, kind: input, shape index: {}]
  %s1 = inlined_call_operand.hbm [shape: bf16[32,128], index: 1, kind: input, shape index: {}]
  %s2 = inlined_call_operand.hbm [shape: bf16[2,128,128], index: 2, kind: input, shape index: {}]
  %s3 = inlined_call_operand.vmem [shape: f32[3,1,128], index: 3, kind: input, shape index: {}]
  %s4 = inlined_call_operand.vmem [shape: bf16[8,128], index: 4, kind: output, shape index: {}]
  %s5 = sld [smem:[#allocation0]]
  $region38: #{fused_mlp_forward.1} parent=0
    _
  %s7 = ssub.s32 1, %s5
  %s8 = scalar_select 0, %s7, %s5
  $region1: #{fused_mlp_forward.1} parent=0
    #allocation2 [shape = 'u8[4096]{0}', space=vmem, size = 0x1000, scoped, tag = 'input window, operand 0, single buffered']
    #allocation3 [shape = 's32[1]{0}', space=sflag, size = 0x4, scoped, tag = 'scoped memory for fused_mlp_forward.1']
    #allocation4 [shape = 'u8[8192]{0}', space=vmem, size = 0x2000, scoped, tag = 'input window, operand 1, single buffered']
    #allocation5 [shape = 's32[1]{0}', space=sflag, size = 0x4, scoped, tag = 'scoped memory for fused_mlp_forward.1']
    #allocation6 [shape = 'u8[65536]{0}', space=vmem, size = 0x10000, scoped, tag = 'input window, operand 2, single buffered']
    %9 = vsyncpa [#allocation3], 0
    %10 = vsyncpa [#allocation5], 0
    // Predicated region
    $region2: #{fused_mlp_forward.1} parent=1 // pred_check
      _
    $region3: #{fused_mlp_forward.1} parent=1 // pred_check_branch
      %12 = sbr.rel (0) target = $region5
    $region4: #{fused_mlp_forward.1} parent=1 // pred_region
      %s14 = ssub.s32 128, 128
      %15 = vsyncadd [#allocation3], %s14
      %s17 = sshll.u32 [#allocation2], 4
      %s18 = int_to_ptr.vmem [resolvable:$true] %s17
      %20 = dma.hbm_to_vmem [thread:$0]  %s0, 128, %s18, [#allocation3]
    $region5: #{fused_mlp_forward.1} parent=1 // pred_fallthru
      _
    // Predicated region
    $region6: #{fused_mlp_forward.1} parent=1 // pred_check
      _
    $region7: #{fused_mlp_forward.1} parent=1 // pred_check_branch
      %22 = sbr.rel (0) target = $region9
    $region8: #{fused_mlp_forward.1} parent=1 // pred_region
      %s24 = ssub.s32 256, 256
      %25 = vsyncadd [#allocation5], %s24
      %s26 = sshll.u32 [#allocation4], 4
      %s27 = int_to_ptr.vmem [resolvable:$true] %s26
      %32 = dma.hbm_to_vmem [thread:$0]  %s1, 256, %s27, [#allocation5], 64, 64, 4
    $region9: #{fused_mlp_forward.1} parent=1 // pred_fallthru
      _
    // Predicated region
    $region10: #{fused_mlp_forward.1} parent=1 // pred_check
      _
    $region11: #{fused_mlp_forward.1} parent=1 // pred_check_branch
      %34 = sbr.rel (0) target = $region13
    $region12: #{fused_mlp_forward.1} parent=1 // pred_region
      %s36 = ssub.s32 2048, 2048
      %37 = vsyncadd [#allocation5], %s36
      %s38 = sshll.u32 [#allocation6], 4
      %s39 = int_to_ptr.vmem [resolvable:$true] %s38
      %44 = dma.hbm_to_vmem [thread:$0]  %s2, 2048, %s39, [#allocation5], 64, 64, 4
    $region13: #{fused_mlp_forward.1} parent=1 // pred_fallthru
      _
    // Predicated region
    $region14: #{fused_mlp_forward.1} parent=1 // pred_check
      _
    $region15: #{fused_mlp_forward.1} parent=1 // pred_check_branch
      %46 = sbr.rel (0) target = $region17
    $region16: #{fused_mlp_forward.1} parent=1 // pred_region
      _
    $region17: #{fused_mlp_forward.1} parent=1 // pred_fallthru
      _
    // Predicated region
    $region18: #{fused_mlp_forward.1} parent=1 // pred_check
      _
    $region19: #{fused_mlp_forward.1} parent=1 // pred_check_branch
      %48 = sbr.rel (0) target = $region21
    $region20: #{fused_mlp_forward.1} parent=1 // pred_region
      %49 = dma.done [#allocation3], 128
    $region21: #{fused_mlp_forward.1} parent=1 // pred_fallthru
      _
    // Predicated region
    $region22: #{fused_mlp_forward.1} parent=1 // pred_check
      _
    $region23: #{fused_mlp_forward.1} parent=1 // pred_check_branch
      %51 = sbr.rel (0) target = $region25
    $region24: #{fused_mlp_forward.1} parent=1 // pred_region
      %52 = dma.done [#allocation5], 256
    $region25: #{fused_mlp_forward.1} parent=1 // pred_fallthru
      _
    // Predicated region
    $region26: #{fused_mlp_forward.1} parent=1 // pred_check
      _
    $region27: #{fused_mlp_forward.1} parent=1 // pred_check_branch
      %54 = sbr.rel (0) target = $region29
    $region28: #{fused_mlp_forward.1} parent=1 // pred_region
      %55 = dma.done [#allocation5], 2048
    $region29: #{fused_mlp_forward.1} parent=1 // pred_fallthru
      _
    %v57 = vld [vmem:[#allocation2] sm:$0xff]
    %v58 = vpack.c.bf16 %v57, %v57
    %v59 = vld [vmem:[#allocation4] sm:$0xf]
    %v60 = vld [vmem:[#allocation4 + $0x4] sm:$0xf]
    %v61 = vld [vmem:[#allocation4 + $0x8] sm:$0xf]
    %v62 = vld [vmem:[#allocation4 + $0xc] sm:$0xf]
    %v63 = vld [vmem:[%s3] sm:$0x1]
    %v65 = vlaneseq
    %v66 = vshrl.u32 %v65, 7
    %v67 = vsub.s32 0, %v66
    %v68 = vrot.slane %v63, %v67
    %v74 = vunpack.c.l.b16 %v59
    %v75 = vunpack.c.l.b16 %v60
    %v76 = vunpack.c.l.b16 %v61
    %v77 = vunpack.c.l.b16 %v62
    %v78 = vpack.c.b16 %v75, %v74
    %v79 = vpack.c.b16 %v77, %v76
    %vm82 = vcmask 261120
    %v84 = vsel %vm82, %v58, 0
    %86 = vmatprep.subr.bf16.mxu0 0
    %87 = vmatpush1.bf16.msra.mxu0 %v78
    %88 = vmatprep.subr.bf16.mxu0 0
    %89 = vmatpush1.bf16.msra.mxu0 %v79
    %90 = vmatprep.subr.bf16.mxu0 0
    %91 = vmatpush1.bf16.msra.mxu0 0
    %92 = vmatprep.subr.bf16.mxu0 0
    %93 = vmatpush1.bf16.msra.mxu0 0
    %94 = vmatprep.subr.bf16.mxu0 0
    %95 = vmatpush1.bf16.msra.mxu0 0
    %96 = vmatprep.subr.bf16.mxu0 0
    %97 = vmatpush1.bf16.msra.mxu0 0
    %98 = vmatprep.subr.bf16.mxu0 0
    %99 = vmatpush1.bf16.msra.mxu0 0
    %100 = vmatprep.subr.bf16.mxu0 0
    %101 = vmatpush1.bf16.msra.mxu0 0
    %102 = vmatprep.subr.bf16.mxu0 0
    %103 = vmatpush1.bf16.msra.mxu0 0
    %104 = vmatprep.subr.bf16.mxu0 0
    %105 = vmatpush1.bf16.msra.mxu0 0
    %106 = vmatprep.subr.bf16.mxu0 0
    %107 = vmatpush1.bf16.msra.mxu0 0
    %108 = vmatprep.subr.bf16.mxu0 0
    %109 = vmatpush1.bf16.msra.mxu0 0
    %110 = vmatprep.subr.bf16.mxu0 0
    %111 = vmatpush1.bf16.msra.mxu0 0
    %112 = vmatprep.subr.bf16.mxu0 0
    %113 = vmatpush1.bf16.msra.mxu0 0
    %114 = vmatprep.subr.bf16.mxu0 0
    %115 = vmatpush1.bf16.msra.mxu0 0
    %116 = vmatprep.subr.bf16.mxu0 0
    %117 = vmatpush1.bf16.msra.mxu0 0
    %118 = vmatprep.mubr.bf16.mxu0 0
    %119 = vmatmul.mubr.bf16.gmra.mrb[0].mxu0 %v84
    %v120 = vpop.f32.mrb[0].mxu0
    %v121 = vadd.f32 %v68, %v120
    %v122 = vpop.f32.mrb[0].mxu0
    %v123 = vpop.f32.mrb[0].mxu0
    %v124 = vpop.f32.mrb[0].mxu0
    %125 = vdwg.mxu0
    %v126 = vmax.f32 %v121, 0.0
    %v127 = vpack.c.bf16 %v126, %v126
    %v128 = vld [vmem:[#allocation6] sm:$0xf]
    %v129 = vld [vmem:[#allocation6 + $0x4] sm:$0xf]
    %v130 = vld [vmem:[#allocation6 + $0x8] sm:$0xf]
    %v131 = vld [vmem:[#allocation6 + $0xc] sm:$0xf]
    %v132 = vld [vmem:[#allocation6 + $0x10] sm:$0xf]
    %v133 = vld [vmem:[#allocation6 + $0x14] sm:$0xf]
    %v134 = vld [vmem:[#allocation6 + $0x18] sm:$0xf]
    %v135 = vld [vmem:[#allocation6 + $0x1c] sm:$0xf]
    %v136 = vld [vmem:[#allocation6 + $0x20] sm:$0xf]
    %v137 = vld [vmem:[#allocation6 + $0x24] sm:$0xf]
    %v138 = vld [vmem:[#allocation6 + $0x28] sm:$0xf]
    %v139 = vld [vmem:[#allocation6 + $0x2c] sm:$0xf]
    %v140 = vld [vmem:[#allocation6 + $0x30] sm:$0xf]
    %v141 = vld [vmem:[#allocation6 + $0x34] sm:$0xf]
    %v142 = vld [vmem:[#allocation6 + $0x38] sm:$0xf]
    %v143 = vld [vmem:[#allocation6 + $0x3c] sm:$0xf]
    %s144 = scalar_lea.vmem %s3, 1
    %v145 = vld [vmem:[%s144] sm:$0x1]
    %v147 = vlaneseq
    %v148 = vshrl.u32 %v147, 7
    %v149 = vsub.s32 0, %v148
    %v150 = vrot.slane %v145, %v149
    %v168 = vunpack.c.l.b16 %v128
    %v169 = vunpack.c.l.b16 %v129
    %v170 = vunpack.c.l.b16 %v130
    %v171 = vunpack.c.l.b16 %v131
    %v172 = vunpack.c.l.b16 %v132
    %v173 = vunpack.c.l.b16 %v133
    %v174 = vunpack.c.l.b16 %v134
    %v175 = vunpack.c.l.b16 %v135
    %v176 = vunpack.c.l.b16 %v136
    %v177 = vunpack.c.l.b16 %v137
    %v178 = vunpack.c.l.b16 %v138
    %v179 = vunpack.c.l.b16 %v139
    %v180 = vunpack.c.l.b16 %v140
    %v181 = vunpack.c.l.b16 %v141
    %v182 = vunpack.c.l.b16 %v142
    %v183 = vunpack.c.l.b16 %v143
    %v184 = vpack.c.b16 %v169, %v168
    %v185 = vpack.c.b16 %v171, %v170
    %v186 = vpack.c.b16 %v173, %v172
    %v187 = vpack.c.b16 %v175, %v174
    %v188 = vpack.c.b16 %v177, %v176
    %v189 = vpack.c.b16 %v179, %v178
    %v190 = vpack.c.b16 %v181, %v180
    %v191 = vpack.c.b16 %v183, %v182
    %200 = vmatprep.subr.bf16.mxu0 0
    %201 = vmatpush1.bf16.msra.mxu0 %v184
    %202 = vmatprep.subr.bf16.mxu0 0
    %203 = vmatpush1.bf16.msra.mxu0 %v185
    %204 = vmatprep.subr.bf16.mxu0 0
    %205 = vmatpush1.bf16.msra.mxu0 %v186
    %206 = vmatprep.subr.bf16.mxu0 0
    %207 = vmatpush1.bf16.msra.mxu0 %v187
    %208 = vmatprep.subr.bf16.mxu0 0
    %209 = vmatpush1.bf16.msra.mxu0 %v188
    %210 = vmatprep.subr.bf16.mxu0 0
    %211 = vmatpush1.bf16.msra.mxu0 %v189
    %212 = vmatprep.subr.bf16.mxu0 0
    %213 = vmatpush1.bf16.msra.mxu0 %v190
    %214 = vmatprep.subr.bf16.mxu0 0
    %215 = vmatpush1.bf16.msra.mxu0 %v191
    %216 = vmatprep.subr.bf16.mxu0 0
    %217 = vmatpush1.bf16.msra.mxu0 0
    %218 = vmatprep.subr.bf16.mxu0 0
    %219 = vmatpush1.bf16.msra.mxu0 0
    %220 = vmatprep.subr.bf16.mxu0 0
    %221 = vmatpush1.bf16.msra.mxu0 0
    %222 = vmatprep.subr.bf16.mxu0 0
    %223 = vmatpush1.bf16.msra.mxu0 0
    %224 = vmatprep.subr.bf16.mxu0 0
    %225 = vmatpush1.bf16.msra.mxu0 0
    %226 = vmatprep.subr.bf16.mxu0 0
    %227 = vmatpush1.bf16.msra.mxu0 0
    %228 = vmatprep.subr.bf16.mxu0 0
    %229 = vmatpush1.bf16.msra.mxu0 0
    %230 = vmatprep.subr.bf16.mxu0 0
    %231 = vmatpush1.bf16.msra.mxu0 0
    %232 = vmatprep.mubr.bf16.mxu0 0
    %233 = vmatmul.mubr.bf16.gmra.mrb[0].mxu0 %v127
    %v234 = vpop.f32.mrb[0].mxu0
    %v235 = vadd.f32 %v150, %v234
    %v236 = vpop.f32.mrb[0].mxu0
    %v237 = vpop.f32.mrb[0].mxu0
    %v238 = vpop.f32.mrb[0].mxu0
    %239 = vdwg.mxu0
    %v240 = vmax.f32 %v235, 0.0
    %v241 = vpack.c.bf16 %v240, %v240
    %s242 = scalar_lea.vmem [#allocation6], 64
    %v243 = vld [vmem:[%s242] sm:$0xf]
    %v244 = vld [vmem:[%s242 + $0x4] sm:$0xf]
    %v245 = vld [vmem:[%s242 + $0x8] sm:$0xf]
    %v246 = vld [vmem:[%s242 + $0xc] sm:$0xf]
    %v247 = vld [vmem:[%s242 + $0x10] sm:$0xf]
    %v248 = vld [vmem:[%s242 + $0x14] sm:$0xf]
    %v249 = vld [vmem:[%s242 + $0x18] sm:$0xf]
    %v250 = vld [vmem:[%s242 + $0x1c] sm:$0xf]
    %v251 = vld [vmem:[%s242 + $0x20] sm:$0xf]
    %v252 = vld [vmem:[%s242 + $0x24] sm:$0xf]
    %v253 = vld [vmem:[%s242 + $0x28] sm:$0xf]
    %v254 = vld [vmem:[%s242 + $0x2c] sm:$0xf]
    %v255 = vld [vmem:[%s242 + $0x30] sm:$0xf]
    %v256 = vld [vmem:[%s242 + $0x34] sm:$0xf]
    %v257 = vld [vmem:[%s242 + $0x38] sm:$0xf]
    %v258 = vld [vmem:[%s242 + $0x3c] sm:$0xf]
    %s259 = scalar_lea.vmem %s3, 2
    %v260 = vld [vmem:[%s259] sm:$0x1]
    %v262 = vlaneseq
    %v263 = vshrl.u32 %v262, 7
    %v264 = vsub.s32 0, %v263
    %v265 = vrot.slane %v260, %v264
    %v283 = vunpack.c.l.b16 %v243
    %v284 = vunpack.c.l.b16 %v244
    %v285 = vunpack.c.l.b16 %v245
    %v286 = vunpack.c.l.b16 %v246
    %v287 = vunpack.c.l.b16 %v247
    %v288 = vunpack.c.l.b16 %v248
    %v289 = vunpack.c.l.b16 %v249
    %v290 = vunpack.c.l.b16 %v250
    %v291 = vunpack.c.l.b16 %v251
    %v292 = vunpack.c.l.b16 %v252
    %v293 = vunpack.c.l.b16 %v253
    %v294 = vunpack.c.l.b16 %v254
    %v295 = vunpack.c.l.b16 %v255
    %v296 = vunpack.c.l.b16 %v256
    %v297 = vunpack.c.l.b16 %v257
    %v298 = vunpack.c.l.b16 %v258
    %v299 = vpack.c.b16 %v284, %v283
    %v300 = vpack.c.b16 %v286, %v285
    %v301 = vpack.c.b16 %v288, %v287
    %v302 = vpack.c.b16 %v290, %v289
    %v303 = vpack.c.b16 %v292, %v291
    %v304 = vpack.c.b16 %v294, %v293
    %v305 = vpack.c.b16 %v296, %v295
    %v306 = vpack.c.b16 %v298, %v297
    %315 = vmatprep.subr.bf16.mxu0 0
    %316 = vmatpush1.bf16.msra.mxu0 %v299
    %317 = vmatprep.subr.bf16.mxu0 0
    %318 = vmatpush1.bf16.msra.mxu0 %v300
    %319 = vmatprep.subr.bf16.mxu0 0
    %320 = vmatpush1.bf16.msra.mxu0 %v301
    %321 = vmatprep.subr.bf16.mxu0 0
    %322 = vmatpush1.bf16.msra.mxu0 %v302
    %323 = vmatprep.subr.bf16.mxu0 0
    %324 = vmatpush1.bf16.msra.mxu0 %v303
    %325 = vmatprep.subr.bf16.mxu0 0
    %326 = vmatpush1.bf16.msra.mxu0 %v304
    %327 = vmatprep.subr.bf16.mxu0 0
    %328 = vmatpush1.bf16.msra.mxu0 %v305
    %329 = vmatprep.subr.bf16.mxu0 0
    %330 = vmatpush1.bf16.msra.mxu0 %v306
    %331 = vmatprep.subr.bf16.mxu0 0
    %332 = vmatpush1.bf16.msra.mxu0 0
    %333 = vmatprep.subr.bf16.mxu0 0
    %334 = vmatpush1.bf16.msra.mxu0 0
    %335 = vmatprep.subr.bf16.mxu0 0
    %336 = vmatpush1.bf16.msra.mxu0 0
    %337 = vmatprep.subr.bf16.mxu0 0
    %338 = vmatpush1.bf16.msra.mxu0 0
    %339 = vmatprep.subr.bf16.mxu0 0
    %340 = vmatpush1.bf16.msra.mxu0 0
    %341 = vmatprep.subr.bf16.mxu0 0
    %342 = vmatpush1.bf16.msra.mxu0 0
    %343 = vmatprep.subr.bf16.mxu0 0
    %344 = vmatpush1.bf16.msra.mxu0 0
    %345 = vmatprep.subr.bf16.mxu0 0
    %346 = vmatpush1.bf16.msra.mxu0 0
    %347 = vmatprep.mubr.bf16.mxu0 0
    %348 = vmatmul.mubr.bf16.gmra.mrb[0].mxu0 %v241
    %v349 = vpop.f32.mrb[0].mxu0
    %v350 = vadd.f32 %v265, %v349
    %v351 = vpop.f32.mrb[0].mxu0
    %v352 = vpop.f32.mrb[0].mxu0
    %v353 = vpop.f32.mrb[0].mxu0
    %354 = vdwg.mxu0
    %v355 = vpack.c.bf16 %v350, %v350
    %356 = vst [vmem:[%s4] sm:$0xf] %v355
    // Predicated region
    $region30: #{fused_mlp_forward.1} parent=1 // pred_check
      _
    $region31: #{fused_mlp_forward.1} parent=1 // pred_check_branch
      %358 = sbr.rel (0) target = $region33
    $region32: #{fused_mlp_forward.1} parent=1 // pred_region
      _
    $region33: #{fused_mlp_forward.1} parent=1 // pred_fallthru
      _
    // Predicated region
    $region34: #{fused_mlp_forward.1} parent=1 // pred_check
      _
    $region35: #{fused_mlp_forward.1} parent=1 // pred_check_branch
      %360 = sbr.rel (0) target = $region37
    $region36: #{fused_mlp_forward.1} parent=1 // pred_region
      _
    $region37: #{fused_mlp_forward.1} parent=1 // pred_fallthru
      _
    %361 = vsyncpa [#allocation3], 1
    %362 = vsyncpa [#allocation5], 1

</llo_original>
